<compile_context>
chip_gen: v5e
topology: v5e:2x2
jax: 0.10.0
libtpu: 0.0.40
codegen_flags: <defaults>
</compile_context>

<pallas_src>
import functools

import jax
import jax.numpy as jnp
from jax.experimental import pallas as pl
from jax.experimental.pallas import tpu as pltpu


# ----------------------------------------------------------------------------
# Pallas kernel: one batch block per grid step
# ----------------------------------------------------------------------------
def _narre_net_kernel(rev_ref,     # (Bb, R, L, D)  word-embedded reviews
                      uiid_ref,    # (Bb, R, E)     ui/iu id embeddings (f32)
                      cnn_w_ref,   # (D, K*F)  tap k occupies lanes [k*F,(k+1)*F)
                      cnn_b_ref,   # (1, F)   f32
                      rev_w_ref,   # (F, E)   review_linear weight
                      rev_b_ref,   # (1, E)   f32
                      id_w_ref,    # (E, E)   id_linear weight (no bias)
                      att_w_ref,   # (1, E)   attention weight (row)
                      att_b_ref,   # (1, 1)
                      fc_w_ref,    # (F, E)
                      fc_b_ref,    # (1, E)   f32
                      out_ref,     # (Bb, E) or (E, Bb)
                      *, transpose_out):
    Bb, R, L, D = rev_ref.shape
    KF = cnn_w_ref.shape[-1]
    F = cnn_b_ref.shape[-1]
    K = KF // F
    E = rev_w_ref.shape[-1]
    L_out = L - K + 1
    mm_dt = rev_w_ref.dtype          # matmul operand dtype (f32 or bf16)

    # ---- text CNN: ONE wide matmul over all word positions ------------------
    x = rev_ref[...]                                           # (Bb, R, L, D)
    taps = jnp.dot(x.reshape(Bb * R * L, D), cnn_w_ref[...],
                   preferred_element_type=jnp.float32)         # (Bb*R*L, K*F)
    taps = taps.reshape(Bb, R, L, KF)
    # combine the K taps with sublane-shifted adds along L
    conv = taps[:, :, 0:L_out, 0:F]
    for k in range(1, K):                                      # static, K small
        conv = conv + taps[:, :, k:k + L_out, k * F:(k + 1) * F]
    # bias + ReLU hoisted outside the max-pool (bias const over pool axis,
    # ReLU monotone -> identical result).
    fea = jnp.maximum(jnp.max(conv, axis=2) + cnn_b_ref[...], 0.0)  # (Bb,R,F)

    # ---- review attention: two resident-weight dots, no lane concat ---------
    uiid = jnp.maximum(uiid_ref[...], 0.0)                     # (Bb, R, E)
    rs = (jnp.dot(fea.reshape(Bb * R, F).astype(mm_dt), rev_w_ref[...],
                  preferred_element_type=jnp.float32)
          + jnp.dot(uiid.reshape(Bb * R, E).astype(mm_dt), id_w_ref[...],
                    preferred_element_type=jnp.float32)
          + rev_b_ref[...])
    rs_mix = jnp.maximum(rs, 0.0).reshape(Bb, R, E)

    # attention score: VPU multiply + lane reduce (avoid an N=1 MXU matmul)
    att = (jnp.sum(rs_mix * att_w_ref[...], axis=-1, keepdims=True)
           + att_b_ref[...])                                   # (Bb, R, 1)
    att = att - jnp.max(att, axis=1, keepdims=True)
    w = jnp.exp(att)
    w = w * pl.reciprocal(jnp.sum(w, axis=1, keepdims=True), approx=True)

    r_fea = jnp.sum(fea * w, axis=1)                           # (Bb, F)
    # dropout: eval-mode identity (nn.Dropout is a no-op at inference)
    fc = (jnp.dot(r_fea.astype(mm_dt), fc_w_ref[...],
                  preferred_element_type=jnp.float32)
          + fc_b_ref[...])                                     # (Bb, E)
    if transpose_out:
        out_ref[...] = fc.T                                    # (E, Bb) lane-dense
    else:
        out_ref[...] = fc


# ----------------------------------------------------------------------------
# Wrapper: embedding gathers, batch blocking/padding, weight reshaping
# ----------------------------------------------------------------------------
def net_forward_pallas(params, reviews, ids, ids_list, *, kernel_size,
                       block_b=128, matmul_dtype=jnp.float32,
                       review_buffers=2):
    """One NARRE Net (user or item side). Embedding gathers are glue JAX."""
    del kernel_size  # derived from cnn_w shape
    md = jnp.dtype(matmul_dtype)

    rev_emb = jnp.take(params["word_embs"], reviews, axis=0).astype(md)  # (B,R,L,D)
    id_emb = jnp.take(params["id_embedding"], ids, axis=0)               # (B,E)
    uiid_emb = jnp.take(params["ui_id_embedding"], ids_list, axis=0)     # (B,R,E)

    B, R, L, D = rev_emb.shape
    E = id_emb.shape[-1]
    K, _, F = params["cnn_w"].shape

    # ---- batch blocking: big blocks, modest padding --------------------------
    if B <= block_b:
        bb, B_pad = B, B                      # single full-array block, no padding
    else:
        g = pl.cdiv(B, block_b)               # number of grid steps (>= 2)
        bb = pl.cdiv(pl.cdiv(B, g), 8) * 8    # balanced, sublane-aligned block
        B_pad = g * bb
    if B_pad != B:
        rev_emb = jnp.pad(rev_emb, ((0, B_pad - B), (0, 0), (0, 0), (0, 0)))
        uiid_emb = jnp.pad(uiid_emb, ((0, B_pad - B), (0, 0), (0, 0)))
    # lane-dense output only pays off (and is tile-legal) when bb % 128 == 0
    transpose_out = (bb % 128 == 0)

    # ---- weights in kernel layout --------------------------------------------
    # cnn_w (K, D, F) -> wide (D, K*F) so that wide[:, k*F:(k+1)*F] == cnn_w[k]
    cnn_w_wide = jnp.transpose(params["cnn_w"], (1, 0, 2)).reshape(D, K * F)
    cnn_w_wide = cnn_w_wide.astype(md)
    rev_w = params["review_w"].astype(md)
    id_w = params["id_w"].astype(md)
    fc_w = params["fc_w"].astype(md)
    att_w = params["attn_w"].T.astype(jnp.float32)             # (1, E)

    # optional deeper pipelining on the dominant (reviews) stream — v5e knob
    rev_kwargs = {}
    if review_buffers > 2:
        rev_kwargs["pipeline_mode"] = pl.Buffered(review_buffers)

    elt = md.itemsize
    flops = (2 * B_pad * R * (L * D * K * F + F * E + E * E + F)
             + 2 * B_pad * F * E)
    bytes_accessed = (elt * (B_pad * R * L * D + D * K * F + F * E + E * E + F * E)
                      + 4 * (B_pad * (R * E + E) + F + 3 * E + 1))

    if transpose_out:
        out_shape = jax.ShapeDtypeStruct((E, B_pad), jnp.float32)
        out_spec = pl.BlockSpec((E, bb), lambda i: (0, i))
    else:
        out_shape = jax.ShapeDtypeStruct((B_pad, E), jnp.float32)
        out_spec = pl.BlockSpec((bb, E), lambda i: (i, 0))

    fc = pl.pallas_call(
        functools.partial(_narre_net_kernel, transpose_out=transpose_out),
        out_shape=out_shape,
        grid=(B_pad // bb,),
        in_specs=[
            pl.BlockSpec((bb, R, L, D), lambda i: (i, 0, 0, 0), **rev_kwargs),
            pl.BlockSpec((bb, R, E),    lambda i: (i, 0, 0)),      # ui/iu id emb
            pl.BlockSpec((D, K * F),    lambda i: (0, 0)),         # cnn_w (wide)
            pl.BlockSpec((1, F),        lambda i: (0, 0)),         # cnn_b
            pl.BlockSpec((F, E),        lambda i: (0, 0)),         # review_w
            pl.BlockSpec((1, E),        lambda i: (0, 0)),         # review_b
            pl.BlockSpec((E, E),        lambda i: (0, 0)),         # id_w
            pl.BlockSpec((1, E),        lambda i: (0, 0)),         # attn_w (row)
            pl.BlockSpec((1, 1),        lambda i: (0, 0)),         # attn_b
            pl.BlockSpec((F, E),        lambda i: (0, 0)),         # fc_w
            pl.BlockSpec((1, E),        lambda i: (0, 0)),         # fc_b
        ],
        out_specs=out_spec,
        compiler_params=pltpu.CompilerParams(
            dimension_semantics=("parallel",),       # shards grid across TCs (v7x)
            vmem_limit_bytes=32 * 1024 * 1024),
        cost_estimate=pl.CostEstimate(flops=flops,
                                      transcendentals=B_pad * R + B_pad,
                                      bytes_accessed=bytes_accessed),
    )(rev_emb, uiid_emb,
      cnn_w_wide, params["cnn_b"],
      rev_w, params["review_b"], id_w,
      att_w, params["attn_b"],
      fc_w, params["fc_b"])

    fc = (fc.T if transpose_out else fc)[:B]
    # torch.stack([id_emb, fc_layer(r_fea)], 1): id-embedding passthrough is
    # pure data movement, so it stays out of the kernel.
    return jnp.stack([id_emb, fc], axis=1)                     # (B, 2, E)


# ----------------------------------------------------------------------------
# Pure-JAX reference (same math, used only as a correctness check)
# ----------------------------------------------------------------------------
def net_forward_ref(params, reviews, ids, ids_list, *, kernel_size):
    rev_emb = jnp.take(params["word_embs"], reviews, axis=0)        # (B,R,L,D)
    id_emb = jnp.take(params["id_embedding"], ids, axis=0)          # (B,E)
    uiid = jnp.take(params["ui_id_embedding"], ids_list, axis=0)    # (B,R,E)
    B, R, L, D = rev_emb.shape
    K = kernel_size
    L_out = L - K + 1
    windows = jnp.stack([rev_emb[:, :, t:t + K, :] for t in range(L_out)],
                        axis=2)                                     # (B,R,Lo,K,D)
    conv = jnp.einsum("brtkd,kdf->brtf", windows, params["cnn_w"]) \
        + params["cnn_b"][0]
    fea = jnp.max(jax.nn.relu(conv), axis=2)                        # (B,R,F)
    rs_mix = jax.nn.relu(fea @ params["review_w"] + params["review_b"][0]
                         + jax.nn.relu(uiid) @ params["id_w"])
    att = rs_mix @ params["attn_w"] + params["attn_b"][0]           # (B,R,1)
    w = jax.nn.softmax(att, axis=1)
    r_fea = jnp.sum(fea * w, axis=1)                                # (B,F)
    fc = r_fea @ params["fc_w"] + params["fc_b"][0]                 # (B,E)
    return jnp.stack([id_emb, fc], axis=1)                          # (B,2,E)


# ----------------------------------------------------------------------------
# Deterministic parameter construction (mirrors Net.reset_para init styles)
# ----------------------------------------------------------------------------
def make_net_params(key, *, id_num, ui_id_num, vocab_size, word_dim,
                    id_emb_size, filters_num, kernel_size):
    ks = jax.random.split(key, 8)
    E, F, D, K = id_emb_size, filters_num, word_dim, kernel_size
    xavier_cnn = (2.0 / (K * D + F)) ** 0.5
    xavier_w2v = (2.0 / (vocab_size + D)) ** 0.5
    u = lambda k, s: jax.random.uniform(k, s, jnp.float32, -0.1, 0.1)
    return {
        "id_embedding": u(ks[0], (id_num, E)),
        "word_embs": jax.random.normal(ks[1], (vocab_size, D),
                                       jnp.float32) * xavier_w2v,
        "ui_id_embedding": u(ks[2], (ui_id_num, E)),
        "cnn_w": jax.random.normal(ks[3], (K, D, F), jnp.float32) * xavier_cnn,
        "cnn_b": jnp.full((1, F), 0.1, jnp.float32),
        "review_w": u(ks[4], (F, E)),
        "review_b": jnp.full((1, E), 0.1, jnp.float32),
        "id_w": u(ks[5], (E, E)),
        "attn_w": u(ks[6], (E, 1)),
        "attn_b": jnp.full((1, 1), 0.1, jnp.float32),
        "fc_w": u(ks[7], (F, E)),
        "fc_b": jnp.full((1, E), 0.1, jnp.float32),
    }


def narre_forward(user_params, item_params, datas, *, kernel_size):
    (user_reviews, item_reviews, uids, iids,
     user_item2id, item_user2id, _user_doc, _item_doc) = datas
    u_fea = net_forward_pallas(user_params, user_reviews, uids, user_item2id,
                               kernel_size=kernel_size)
    i_fea = net_forward_pallas(item_params, item_reviews, iids, item_user2id,
                               kernel_size=kernel_size)
    return u_fea, i_fea


# ----------------------------------------------------------------------------
if __name__ == "__main__":
    # small, forward-consistent hyper-params
    B = 2            # batch
    R = 4            # reviews per user/item
    L = 8            # review length (words)
    D = 32           # word_dim
    E = 32           # id_emb_size
    F = 32           # filters_num
    K = 3            # kernel_size
    VOCAB = 100
    USER_NUM, ITEM_NUM = 20, 30

    root = jax.random.PRNGKey(0)
    k_up, k_ip, k_d = jax.random.split(root, 3)

    user_params = make_net_params(
        k_up, id_num=USER_NUM, ui_id_num=ITEM_NUM, vocab_size=VOCAB,
        word_dim=D, id_emb_size=E, filters_num=F, kernel_size=K)
    item_params = make_net_params(
        k_ip, id_num=ITEM_NUM, ui_id_num=USER_NUM, vocab_size=VOCAB,
        word_dim=D, id_emb_size=E, filters_num=F, kernel_size=K)

    kd = jax.random.split(k_d, 6)
    user_reviews = jax.random.randint(kd[0], (B, R, L), 0, VOCAB, jnp.int32)
    item_reviews = jax.random.randint(kd[1], (B, R, L), 0, VOCAB, jnp.int32)
    uids = jax.random.randint(kd[2], (B,), 0, USER_NUM, jnp.int32)
    iids = jax.random.randint(kd[3], (B,), 0, ITEM_NUM, jnp.int32)
    user_item2id = jax.random.randint(kd[4], (B, R), 0, ITEM_NUM, jnp.int32)
    item_user2id = jax.random.randint(kd[5], (B, R), 0, USER_NUM, jnp.int32)
    user_doc = jnp.zeros((B, L), jnp.int32)   # unused by NARRE forward
    item_doc = jnp.zeros((B, L), jnp.int32)   # unused by NARRE forward

    datas = (user_reviews, item_reviews, uids, iids,
             user_item2id, item_user2id, user_doc, item_doc)

    # ---- main demo (f32, single-block path) ---------------------------------
    u_fea, i_fea = narre_forward(user_params, item_params, datas,
                                 kernel_size=K)
    jax.block_until_ready((u_fea, i_fea))

    u_ref = net_forward_ref(user_params, user_reviews, uids, user_item2id,
                            kernel_size=K)
    i_ref = net_forward_ref(item_params, item_reviews, iids, item_user2id,
                            kernel_size=K)
    assert u_fea.shape == (B, 2, E) and i_fea.shape == (B, 2, E)
    # tolerance loosened slightly vs exact divide: softmax uses approx recip
    assert jnp.allclose(u_fea, u_ref, atol=5e-3, rtol=5e-3)
    assert jnp.allclose(i_fea, i_ref, atol=5e-3, rtol=5e-3)

    # ---- extra path checks ----------------------------------------------------
    def check_side(Bc, block_b, mdt, tol):
        kk = jax.random.fold_in(root, Bc * 131 + block_b)
        ks = jax.random.split(kk, 3)
        revs = jax.random.randint(ks[0], (Bc, R, L), 0, VOCAB, jnp.int32)
        idsc = jax.random.randint(ks[1], (Bc,), 0, USER_NUM, jnp.int32)
        idls = jax.random.randint(ks[2], (Bc, R), 0, ITEM_NUM, jnp.int32)
        out = net_forward_pallas(user_params, revs, idsc, idls,
                                 kernel_size=K, block_b=block_b,
                                 matmul_dtype=mdt)
        ref = net_forward_ref(user_params, revs, idsc, idls, kernel_size=K)
        jax.block_until_ready(out)
        assert out.shape == (Bc, 2, E)
        assert jnp.allclose(out, ref, atol=tol, rtol=tol)

    check_side(20, 8, jnp.float32, 5e-3)     # multi-step grid + batch padding
    check_side(256, 128, jnp.float32, 5e-3)  # bb=128: lane-dense (E, bb) output
    check_side(2, 128, jnp.bfloat16, 3e-2)   # bf16 matmul operands (v6e/v7x)

    print("KERNEL_OK")
</pallas_src>

<mosaic_0001>
module attributes {stable_mosaic.version = 11 : i64} {
  func.func @_narre_net_kernel(%arg0: i32, %arg1: memref<2x4x8x32xf32, #tpu.memory_space<vmem>>, %arg2: memref<2x4x32xf32, #tpu.memory_space<vmem>>, %arg3: memref<32x96xf32, #tpu.memory_space<vmem>>, %arg4: memref<1x32xf32, #tpu.memory_space<vmem>>, %arg5: memref<32x32xf32, #tpu.memory_space<vmem>>, %arg6: memref<1x32xf32, #tpu.memory_space<vmem>>, %arg7: memref<32x32xf32, #tpu.memory_space<vmem>>, %arg8: memref<1x32xf32, #tpu.memory_space<vmem>>, %arg9: memref<1x1xf32, #tpu.memory_space<vmem>>, %arg10: memref<32x32xf32, #tpu.memory_space<vmem>>, %arg11: memref<1x32xf32, #tpu.memory_space<vmem>>, %arg12: memref<2x32xf32, #tpu.memory_space<vmem>>) attributes {dimension_semantics = [#tpu.dimension_semantics<parallel>], iteration_bounds = array<i64: 1>, scalar_prefetch = 0 : i64, scratch_operands = 0 : i64, tpu.core_type = #tpu.core_type<tc>, window_params = [{transform_indices = @transform_0, window_bounds = array<i64: 2, 4, 8, 32>}, {transform_indices = @transform_1, window_bounds = array<i64: 2, 4, 32>}, {pipeline_mode = #tpu.pipeline_mode<synchronous>, transform_indices = @transform_2, window_bounds = array<i64: 32, 96>}, {pipeline_mode = #tpu.pipeline_mode<synchronous>, transform_indices = @transform_3, window_bounds = array<i64: 1, 32>}, {pipeline_mode = #tpu.pipeline_mode<synchronous>, transform_indices = @transform_4, window_bounds = array<i64: 32, 32>}, {pipeline_mode = #tpu.pipeline_mode<synchronous>, transform_indices = @transform_5, window_bounds = array<i64: 1, 32>}, {pipeline_mode = #tpu.pipeline_mode<synchronous>, transform_indices = @transform_6, window_bounds = array<i64: 32, 32>}, {pipeline_mode = #tpu.pipeline_mode<synchronous>, transform_indices = @transform_7, window_bounds = array<i64: 1, 32>}, {pipeline_mode = #tpu.pipeline_mode<synchronous>, transform_indices = @transform_8, window_bounds = array<i64: 1, 1>}, {pipeline_mode = #tpu.pipeline_mode<synchronous>, transform_indices = @transform_9, window_bounds = array<i64: 32, 32>}, {pipeline_mode = #tpu.pipeline_mode<synchronous>, transform_indices = @transform_10, window_bounds = array<i64: 1, 32>}, {transform_indices = @transform_11, window_bounds = array<i64: 2, 32>}]} {
    %c0 = arith.constant 0 : index
    %c0_0 = arith.constant 0 : index
    %c0_1 = arith.constant 0 : index
    %c0_2 = arith.constant 0 : index
    %0 = vector.load %arg1[%c0, %c0_0, %c0_1, %c0_2] : memref<2x4x8x32xf32, #tpu.memory_space<vmem>>, vector<2x4x8x32xf32>
    %1 = vector.shape_cast %0 : vector<2x4x8x32xf32> to vector<64x32xf32>
    %c0_3 = arith.constant 0 : index
    %c0_4 = arith.constant 0 : index
    %2 = vector.load %arg3[%c0_3, %c0_4] : memref<32x96xf32, #tpu.memory_space<vmem>>, vector<32x96xf32>
    %cst = arith.constant dense<0.000000e+00> : vector<64x96xf32>
    %3 = tpu.matmul %1, %2, %cst {dimension_numbers = #tpu.dot_dimension_numbers<[1], [0], [0], [1], [0, 0, 1, 1], [], []>} : vector<64x32xf32>, vector<32x96xf32>, vector<64x96xf32> -> vector<64x96xf32>
    %4 = vector.shape_cast %3 : vector<64x96xf32> to vector<2x4x8x96xf32>
    %5 = vector.extract_strided_slice %4 {offsets = [0, 0, 0, 0], sizes = [2, 4, 6, 32], strides = [1, 1, 1, 1]} : vector<2x4x8x96xf32> to vector<2x4x6x32xf32>
    %6 = vector.extract_strided_slice %4 {offsets = [0, 0, 1, 32], sizes = [2, 4, 6, 32], strides = [1, 1, 1, 1]} : vector<2x4x8x96xf32> to vector<2x4x6x32xf32>
    %7 = arith.addf %5, %6 : vector<2x4x6x32xf32>
    %8 = vector.extract_strided_slice %4 {offsets = [0, 0, 2, 64], sizes = [2, 4, 6, 32], strides = [1, 1, 1, 1]} : vector<2x4x8x96xf32> to vector<2x4x6x32xf32>
    %9 = arith.addf %7, %8 : vector<2x4x6x32xf32>
    %cst_5 = arith.constant dense<0xFF800000> : vector<2x4x32xf32>
    %10 = vector.multi_reduction <maximumf>, %9, %cst_5 [2] : vector<2x4x6x32xf32> to vector<2x4x32xf32>
    %c0_6 = arith.constant 0 : index
    %c0_7 = arith.constant 0 : index
    %11 = vector.load %arg4[%c0_6, %c0_7] : memref<1x32xf32, #tpu.memory_space<vmem>>, vector<1x32xf32>
    %12 = vector.shape_cast %11 : vector<1x32xf32> to vector<1x1x32xf32>
    %13 = vector.broadcast %12 : vector<1x1x32xf32> to vector<2x4x32xf32>
    %14 = arith.addf %10, %13 : vector<2x4x32xf32>
    %cst_8 = arith.constant 0.000000e+00 : f32
    %15 = vector.broadcast %cst_8 : f32 to vector<2x4x32xf32>
    %16 = arith.maximumf %14, %15 : vector<2x4x32xf32>
    %c0_9 = arith.constant 0 : index
    %c0_10 = arith.constant 0 : index
    %c0_11 = arith.constant 0 : index
    %17 = vector.load %arg2[%c0_9, %c0_10, %c0_11] : memref<2x4x32xf32, #tpu.memory_space<vmem>>, vector<2x4x32xf32>
    %cst_12 = arith.constant 0.000000e+00 : f32
    %18 = vector.broadcast %cst_12 : f32 to vector<2x4x32xf32>
    %19 = arith.maximumf %17, %18 : vector<2x4x32xf32>
    %20 = vector.shape_cast %16 : vector<2x4x32xf32> to vector<8x32xf32>
    %c0_13 = arith.constant 0 : index
    %c0_14 = arith.constant 0 : index
    %21 = vector.load %arg5[%c0_13, %c0_14] : memref<32x32xf32, #tpu.memory_space<vmem>>, vector<32x32xf32>
    %cst_15 = arith.constant dense<0.000000e+00> : vector<8x32xf32>
    %22 = tpu.matmul %20, %21, %cst_15 {dimension_numbers = #tpu.dot_dimension_numbers<[1], [0], [0], [1], [0, 0, 1, 1], [], []>} : vector<8x32xf32>, vector<32x32xf32>, vector<8x32xf32> -> vector<8x32xf32>
    %23 = vector.shape_cast %19 : vector<2x4x32xf32> to vector<8x32xf32>
    %c0_16 = arith.constant 0 : index
    %c0_17 = arith.constant 0 : index
    %24 = vector.load %arg7[%c0_16, %c0_17] : memref<32x32xf32, #tpu.memory_space<vmem>>, vector<32x32xf32>
    %cst_18 = arith.constant dense<0.000000e+00> : vector<8x32xf32>
    %25 = tpu.matmul %23, %24, %cst_18 {dimension_numbers = #tpu.dot_dimension_numbers<[1], [0], [0], [1], [0, 0, 1, 1], [], []>} : vector<8x32xf32>, vector<32x32xf32>, vector<8x32xf32> -> vector<8x32xf32>
    %26 = arith.addf %22, %25 : vector<8x32xf32>
    %c0_19 = arith.constant 0 : index
    %c0_20 = arith.constant 0 : index
    %27 = vector.load %arg6[%c0_19, %c0_20] : memref<1x32xf32, #tpu.memory_space<vmem>>, vector<1x32xf32>
    %28 = vector.broadcast %27 : vector<1x32xf32> to vector<8x32xf32>
    %29 = arith.addf %26, %28 : vector<8x32xf32>
    %cst_21 = arith.constant 0.000000e+00 : f32
    %30 = vector.broadcast %cst_21 : f32 to vector<8x32xf32>
    %31 = arith.maximumf %29, %30 : vector<8x32xf32>
    %32 = vector.shape_cast %31 : vector<8x32xf32> to vector<2x4x32xf32>
    %c0_22 = arith.constant 0 : index
    %c0_23 = arith.constant 0 : index
    %33 = vector.load %arg8[%c0_22, %c0_23] : memref<1x32xf32, #tpu.memory_space<vmem>>, vector<1x32xf32>
    %34 = vector.shape_cast %33 : vector<1x32xf32> to vector<1x1x32xf32>
    %35 = vector.broadcast %34 : vector<1x1x32xf32> to vector<2x4x32xf32>
    %36 = arith.mulf %32, %35 : vector<2x4x32xf32>
    %cst_24 = arith.constant dense<0.000000e+00> : vector<2x4xf32>
    %37 = vector.multi_reduction <add>, %36, %cst_24 [2] : vector<2x4x32xf32> to vector<2x4xf32>
    %38 = vector.shape_cast %37 : vector<2x4xf32> to vector<2x4x1xf32>
    %c0_25 = arith.constant 0 : index
    %c0_26 = arith.constant 0 : index
    %39 = vector.load %arg9[%c0_25, %c0_26] : memref<1x1xf32, #tpu.memory_space<vmem>>, vector<1x1xf32>
    %40 = vector.shape_cast %39 : vector<1x1xf32> to vector<1x1x1xf32>
    %41 = vector.broadcast %40 : vector<1x1x1xf32> to vector<2x4x1xf32>
    %42 = arith.addf %38, %41 : vector<2x4x1xf32>
    %cst_27 = arith.constant dense<0xFF800000> : vector<2x1xf32>
    %43 = vector.multi_reduction <maximumf>, %42, %cst_27 [1] : vector<2x4x1xf32> to vector<2x1xf32>
    %44 = vector.shape_cast %43 : vector<2x1xf32> to vector<2x1x1xf32>
    %45 = vector.broadcast %44 : vector<2x1x1xf32> to vector<2x4x1xf32>
    %46 = arith.subf %42, %45 : vector<2x4x1xf32>
    %47 = math.exp %46 : vector<2x4x1xf32>
    %cst_28 = arith.constant dense<0.000000e+00> : vector<2x1xf32>
    %48 = vector.multi_reduction <add>, %47, %cst_28 [1] : vector<2x4x1xf32> to vector<2x1xf32>
    %49 = vector.shape_cast %48 : vector<2x1xf32> to vector<2x1x1xf32>
    %50 = tpu.reciprocal %49 {approx = true} : vector<2x1x1xf32> -> vector<2x1x1xf32>
    %51 = vector.broadcast %50 : vector<2x1x1xf32> to vector<2x4x1xf32>
    %52 = arith.mulf %47, %51 : vector<2x4x1xf32>
    %53 = vector.broadcast %52 : vector<2x4x1xf32> to vector<2x4x32xf32>
    %54 = arith.mulf %16, %53 : vector<2x4x32xf32>
    %cst_29 = arith.constant dense<0.000000e+00> : vector<2x32xf32>
    %55 = vector.multi_reduction <add>, %54, %cst_29 [1] : vector<2x4x32xf32> to vector<2x32xf32>
    %c0_30 = arith.constant 0 : index
    %c0_31 = arith.constant 0 : index
    %56 = vector.load %arg10[%c0_30, %c0_31] : memref<32x32xf32, #tpu.memory_space<vmem>>, vector<32x32xf32>
    %cst_32 = arith.constant dense<0.000000e+00> : vector<2x32xf32>
    %57 = tpu.matmul %55, %56, %cst_32 {dimension_numbers = #tpu.dot_dimension_numbers<[1], [0], [0], [1], [0, 0, 1, 1], [], []>} : vector<2x32xf32>, vector<32x32xf32>, vector<2x32xf32> -> vector<2x32xf32>
    %c0_33 = arith.constant 0 : index
    %c0_34 = arith.constant 0 : index
    %58 = vector.load %arg11[%c0_33, %c0_34] : memref<1x32xf32, #tpu.memory_space<vmem>>, vector<1x32xf32>
    %59 = vector.broadcast %58 : vector<1x32xf32> to vector<2x32xf32>
    %60 = arith.addf %57, %59 : vector<2x32xf32>
    %c0_35 = arith.constant 0 : index
    %c0_36 = arith.constant 0 : index
    %61 = vector.load %arg12[%c0_35, %c0_36] : memref<2x32xf32, #tpu.memory_space<vmem>>, vector<2x32xf32>
    tpu.vector_store %arg12[%c0_35, %c0_36], %60 {strides = array<i32>} : memref<2x32xf32, #tpu.memory_space<vmem>>, vector<2x32xf32>,
    return
  }
  func.func @transform_0(%arg0: i32) -> (i32, i32, i32, i32) {
    %c0_i32 = arith.constant 0 : i32
    %c0_i32_0 = arith.constant 0 : i32
    %c0_i32_1 = arith.constant 0 : i32
    %c0_i32_2 = arith.constant 0 : i32
    return %arg0, %c0_i32, %c0_i32_0, %c0_i32_1 : i32, i32, i32, i32
  }
  func.func @transform_1(%arg0: i32) -> (i32, i32, i32) {
    %c0_i32 = arith.constant 0 : i32
    %c0_i32_0 = arith.constant 0 : i32
    %c0_i32_1 = arith.constant 0 : i32
    return %arg0, %c0_i32, %c0_i32_0 : i32, i32, i32
  }
  func.func @transform_2(%arg0: i32) -> (i32, i32) {
    %c0_i32 = arith.constant 0 : i32
    %c0_i32_0 = arith.constant 0 : i32
    %c0_i32_1 = arith.constant 0 : i32
    return %c0_i32, %c0_i32_0 : i32, i32
  }
  func.func @transform_3(%arg0: i32) -> (i32, i32) {
    %c0_i32 = arith.constant 0 : i32
    %c0_i32_0 = arith.constant 0 : i32
    %c0_i32_1 = arith.constant 0 : i32
    return %c0_i32, %c0_i32_0 : i32, i32
  }
  func.func @transform_4(%arg0: i32) -> (i32, i32) {
    %c0_i32 = arith.constant 0 : i32
    %c0_i32_0 = arith.constant 0 : i32
    %c0_i32_1 = arith.constant 0 : i32
    return %c0_i32, %c0_i32_0 : i32, i32
  }
  func.func @transform_5(%arg0: i32) -> (i32, i32) {
    %c0_i32 = arith.constant 0 : i32
    %c0_i32_0 = arith.constant 0 : i32
    %c0_i32_1 = arith.constant 0 : i32
    return %c0_i32, %c0_i32_0 : i32, i32
  }
  func.func @transform_6(%arg0: i32) -> (i32, i32) {
    %c0_i32 = arith.constant 0 : i32
    %c0_i32_0 = arith.constant 0 : i32
    %c0_i32_1 = arith.constant 0 : i32
    return %c0_i32, %c0_i32_0 : i32, i32
  }
  func.func @transform_7(%arg0: i32) -> (i32, i32) {
    %c0_i32 = arith.constant 0 : i32
    %c0_i32_0 = arith.constant 0 : i32
    %c0_i32_1 = arith.constant 0 : i32
    return %c0_i32, %c0_i32_0 : i32, i32
  }
  func.func @transform_8(%arg0: i32) -> (i32, i32) {
    %c0_i32 = arith.constant 0 : i32
    %c0_i32_0 = arith.constant 0 : i32
    %c0_i32_1 = arith.constant 0 : i32
    return %c0_i32, %c0_i32_0 : i32, i32
  }
  func.func @transform_9(%arg0: i32) -> (i32, i32) {
    %c0_i32 = arith.constant 0 : i32
    %c0_i32_0 = arith.constant 0 : i32
    %c0_i32_1 = arith.constant 0 : i32
    return %c0_i32, %c0_i32_0 : i32, i32
  }
  func.func @transform_10(%arg0: i32) -> (i32, i32) {
    %c0_i32 = arith.constant 0 : i32
    %c0_i32_0 = arith.constant 0 : i32
    %c0_i32_1 = arith.constant 0 : i32
    return %c0_i32, %c0_i32_0 : i32, i32
  }
  func.func @transform_11(%arg0: i32) -> (i32, i32) {
    %c0_i32 = arith.constant 0 : i32
    %c0_i32_0 = arith.constant 0 : i32
    return %arg0, %c0_i32 : i32, i32
  }
}

</mosaic_0001>

<llo_original>
// kernel: tpu_custom_call.1
$region0: #{tpu_custom_call.1}
  #allocation0 [shape = 'u32[]', space=smem, size = 0x4, offset = 0x4, fixed_abs, tag = 'smem constant byte address 0x4 - core index']
  #allocation1 [shape = 'u32[72,128]{1,0:T(1,128)}', space=vmem, size = 0x9000, scoped, tag = 'internal scratch']
  #allocation2 [shape = 'f32[1,1]{1,0:T(1,128)S(1)}', space=vmem, size = 0x200, scoped, tag = 'scoped memory for tpu_custom_call.1']
  %s0 = inlined_call_operand.hbm [shape: f32[2,4,8,32], index: 0, kind: input, shape index: {}]
  %s1 = inlined_call_operand.hbm [shape: f32[2,4,32], index: 1, kind: input, shape index: {}]
  %s2 = inlined_call_operand.hbm [shape: f32[32,96], index: 2, kind: input, shape index: {}]
  %s3 = inlined_call_operand.vmem [shape: f32[1,32], index: 3, kind: input, shape index: {}]
  %s4 = inlined_call_operand.hbm [shape: f32[32,32], index: 4, kind: input, shape index: {}]
  %s5 = inlined_call_operand.vmem [shape: f32[1,32], index: 5, kind: input, shape index: {}]
  %s6 = inlined_call_operand.hbm [shape: f32[32,32], index: 6, kind: input, shape index: {}]
  %s7 = inlined_call_operand.vmem [shape: f32[1,32], index: 7, kind: input, shape index: {}]
  %s8 = inlined_call_operand.<no memory space> [shape: f32[1,1], index: 8, kind: input, shape index: {}]
  %s9 = inlined_call_operand.hbm [shape: f32[32,32], index: 9, kind: input, shape index: {}]
  %s10 = inlined_call_operand.vmem [shape: f32[1,32], index: 10, kind: input, shape index: {}]
  %s11 = inlined_call_operand.hbm [shape: f32[2,32], index: 11, kind: output, shape index: {}]
  %s12 = sld [smem:[#allocation0]]
  $region78: #{tpu_custom_call.1} parent=0
    _
  %s14 = ssub.s32 1, %s12
  %s15 = scalar_select 0, %s14, %s12
  %v16 = vstv %s8
  %17 = vst [vmem:[#allocation2] sm:$0x1] %v16
  $region1: #{tpu_custom_call.1} parent=0
    #allocation3 [shape = 'u8[32768]{0}', space=vmem, size = 0x8000, scoped, tag = 'input window, operand 0, single buffered']
    #allocation4 [shape = 's32[1]{0}', space=sflag, size = 0x4, scoped, tag = 'scoped memory for tpu_custom_call.1']
    #allocation5 [shape = 's32[1]{0}', space=sflag, size = 0x4, scoped, tag = 'scoped memory for tpu_custom_call.1']
    #allocation6 [shape = 'u8[4096]{0}', space=vmem, size = 0x1000, scoped, tag = 'input window, operand 1, single buffered']
    #allocation7 [shape = 's32[1]{0}', space=sflag, size = 0x4, scoped, tag = 'scoped memory for tpu_custom_call.1']
    #allocation8 [shape = 'u8[16384]{0}', space=vmem, size = 0x4000, scoped, tag = 'input window, operand 2, single buffered']
    #allocation9 [shape = 'u8[16384]{0}', space=vmem, size = 0x4000, scoped, tag = 'input window, operand 4, single buffered']
    #allocation10 [shape = 's32[1]{0}', space=sflag, size = 0x4, scoped, tag = 'scoped memory for tpu_custom_call.1']
    #allocation11 [shape = 'u8[16384]{0}', space=vmem, size = 0x4000, scoped, tag = 'input window, operand 6, single buffered']
    #allocation12 [shape = 'u8[16384]{0}', space=vmem, size = 0x4000, scoped, tag = 'input window, operand 9, single buffered']
    #allocation13 [shape = 's32[1]{0}', space=sflag, size = 0x4, scoped, tag = 'scoped memory for tpu_custom_call.1']
    #allocation14 [shape = 'u8[1024]{0}', space=vmem, size = 0x400, scoped, tag = 'output window, operand 0, single buffered']
    %18 = vsyncpa [#allocation4], 0
    %19 = vsyncpa [#allocation7], 0
    %20 = vsyncpa [#allocation10], 0
    %21 = vsyncpa [#allocation13], 0
    %22 = vsyncpa [#allocation5], 0
    // Predicated region
    $region2: #{tpu_custom_call.1} parent=1 // pred_check
      _
    $region3: #{tpu_custom_call.1} parent=1 // pred_check_branch
      %24 = sbr.rel (0) target = $region5
    $region4: #{tpu_custom_call.1} parent=1 // pred_region
      %26 = vsyncadd [#allocation4], 0
      %s27 = sshll.u32 %s0, 4
      %s28 = int_to_ptr.hbm [resolvable:$true] %s27
      %s29 = sshll.u32 [#allocation3], 4
      %s30 = int_to_ptr.vmem [resolvable:$true] %s29
      %35 = dma.hbm_to_vmem [thread:$0]  %s28, 1024, %s30, [#allocation4], 128, 128, 8
    $region5: #{tpu_custom_call.1} parent=1 // pred_fallthru
      _
    // Predicated region
    $region6: #{tpu_custom_call.1} parent=1 // pred_check
      _
    $region7: #{tpu_custom_call.1} parent=1 // pred_check_branch
      %37 = sbr.rel (0) target = $region9
    $region8: #{tpu_custom_call.1} parent=1 // pred_region
      %39 = vsyncadd [#allocation7], 0
      %s40 = sshll.u32 %s1, 4
      %s41 = int_to_ptr.hbm [resolvable:$true] %s40
      %s42 = sshll.u32 [#allocation6], 4
      %s43 = int_to_ptr.vmem [resolvable:$true] %s42
      %48 = dma.hbm_to_vmem [thread:$0]  %s41, 128, %s43, [#allocation7], 64, 64, 4
    $region9: #{tpu_custom_call.1} parent=1 // pred_fallthru
      _
    // Predicated region
    $region10: #{tpu_custom_call.1} parent=1 // pred_check
      _
    $region11: #{tpu_custom_call.1} parent=1 // pred_check_branch
      %50 = sbr.rel (0) target = $region13
    $region12: #{tpu_custom_call.1} parent=1 // pred_region
      %52 = vsyncadd [#allocation7], 0
      %s53 = sshll.u32 %s2, 4
      %s54 = int_to_ptr.hbm [resolvable:$true] %s53
      %s55 = sshll.u32 [#allocation8], 4
      %s56 = int_to_ptr.vmem [resolvable:$true] %s55
      %61 = dma.hbm_to_vmem [thread:$0]  %s54, 512, %s56, [#allocation7], 128, 128, 8
    $region13: #{tpu_custom_call.1} parent=1 // pred_fallthru
      _
    // Predicated region
    $region14: #{tpu_custom_call.1} parent=1 // pred_check
      _
    $region15: #{tpu_custom_call.1} parent=1 // pred_check_branch
      %63 = sbr.rel (0) target = $region17
    $region16: #{tpu_custom_call.1} parent=1 // pred_region
      _
    $region17: #{tpu_custom_call.1} parent=1 // pred_fallthru
      _
    // Predicated region
    $region18: #{tpu_custom_call.1} parent=1 // pred_check
      _
    $region19: #{tpu_custom_call.1} parent=1 // pred_check_branch
      %65 = sbr.rel (0) target = $region21
    $region20: #{tpu_custom_call.1} parent=1 // pred_region
      %67 = vsyncadd [#allocation10], 0
      %s68 = sshll.u32 %s4, 4
      %s69 = int_to_ptr.hbm [resolvable:$true] %s68
      %s70 = sshll.u32 [#allocation9], 4
      %s71 = int_to_ptr.vmem [resolvable:$true] %s70
      %76 = dma.hbm_to_vmem [thread:$0]  %s69, 512, %s71, [#allocation10], 128, 128, 8
    $region21: #{tpu_custom_call.1} parent=1 // pred_fallthru
      _
    // Predicated region
    $region22: #{tpu_custom_call.1} parent=1 // pred_check
      _
    $region23: #{tpu_custom_call.1} parent=1 // pred_check_branch
      %78 = sbr.rel (0) target = $region25
    $region24: #{tpu_custom_call.1} parent=1 // pred_region
      _
    $region25: #{tpu_custom_call.1} parent=1 // pred_fallthru
      _
    // Predicated region
    $region26: #{tpu_custom_call.1} parent=1 // pred_check
      _
    $region27: #{tpu_custom_call.1} parent=1 // pred_check_branch
      %80 = sbr.rel (0) target = $region29
    $region28: #{tpu_custom_call.1} parent=1 // pred_region
      %82 = vsyncadd [#allocation10], 0
      %s83 = sshll.u32 %s6, 4
      %s84 = int_to_ptr.hbm [resolvable:$true] %s83
      %s85 = sshll.u32 [#allocation11], 4
      %s86 = int_to_ptr.vmem [resolvable:$true] %s85
      %91 = dma.hbm_to_vmem [thread:$0]  %s84, 512, %s86, [#allocation10], 128, 128, 8
    $region29: #{tpu_custom_call.1} parent=1 // pred_fallthru
      _
    // Predicated region
    $region30: #{tpu_custom_call.1} parent=1 // pred_check
      _
    $region31: #{tpu_custom_call.1} parent=1 // pred_check_branch
      %93 = sbr.rel (0) target = $region33
    $region32: #{tpu_custom_call.1} parent=1 // pred_region
      _
    $region33: #{tpu_custom_call.1} parent=1 // pred_fallthru
      _
    // Predicated region
    $region34: #{tpu_custom_call.1} parent=1 // pred_check
      _
    $region35: #{tpu_custom_call.1} parent=1 // pred_check_branch
      %95 = sbr.rel (0) target = $region37
    $region36: #{tpu_custom_call.1} parent=1 // pred_region
      _
    $region37: #{tpu_custom_call.1} parent=1 // pred_fallthru
      _
    // Predicated region
    $region38: #{tpu_custom_call.1} parent=1 // pred_check
      _
    $region39: #{tpu_custom_call.1} parent=1 // pred_check_branch
      %97 = sbr.rel (0) target = $region41
    $region40: #{tpu_custom_call.1} parent=1 // pred_region
      %99 = vsyncadd [#allocation13], 0
      %s100 = sshll.u32 %s9, 4
      %s101 = int_to_ptr.hbm [resolvable:$true] %s100
      %s102 = sshll.u32 [#allocation12], 4
      %s103 = int_to_ptr.vmem [resolvable:$true] %s102
      %108 = dma.hbm_to_vmem [thread:$0]  %s101, 512, %s103, [#allocation13], 128, 128, 8
    $region41: #{tpu_custom_call.1} parent=1 // pred_fallthru
      _
    // Predicated region
    $region42: #{tpu_custom_call.1} parent=1 // pred_check
      _
    $region43: #{tpu_custom_call.1} parent=1 // pred_check_branch
      %110 = sbr.rel (0) target = $region45
    $region44: #{tpu_custom_call.1} parent=1 // pred_region
      _
    $region45: #{tpu_custom_call.1} parent=1 // pred_fallthru
      _
    // Predicated region
    $region46: #{tpu_custom_call.1} parent=1 // pred_check
      _
    $region47: #{tpu_custom_call.1} parent=1 // pred_check_branch
      %112 = sbr.rel (0) target = $region49
    $region48: #{tpu_custom_call.1} parent=1 // pred_region
      %114 = dma.done [#allocation4], 1024
    $region49: #{tpu_custom_call.1} parent=1 // pred_fallthru
      _
    // Predicated region
    $region50: #{tpu_custom_call.1} parent=1 // pred_check
      _
    $region51: #{tpu_custom_call.1} parent=1 // pred_check_branch
      %116 = sbr.rel (0) target = $region53
    $region52: #{tpu_custom_call.1} parent=1 // pred_region
      %118 = dma.done [#allocation7], 128
    $region53: #{tpu_custom_call.1} parent=1 // pred_fallthru
      _
    // Predicated region
    $region54: #{tpu_custom_call.1} parent=1 // pred_check
      _
    $region55: #{tpu_custom_call.1} parent=1 // pred_check_branch
      %120 = sbr.rel (0) target = $region57
    $region56: #{tpu_custom_call.1} parent=1 // pred_region
      %122 = dma.done [#allocation7], 512
    $region57: #{tpu_custom_call.1} parent=1 // pred_fallthru
      _
    // Predicated region
    $region58: #{tpu_custom_call.1} parent=1 // pred_check
      _
    $region59: #{tpu_custom_call.1} parent=1 // pred_check_branch
      %124 = sbr.rel (0) target = $region61
    $region60: #{tpu_custom_call.1} parent=1 // pred_region
      %126 = dma.done [#allocation10], 512
    $region61: #{tpu_custom_call.1} parent=1 // pred_fallthru
      _
    // Predicated region
    $region62: #{tpu_custom_call.1} parent=1 // pred_check
      _
    $region63: #{tpu_custom_call.1} parent=1 // pred_check_branch
      %128 = sbr.rel (0) target = $region65
    $region64: #{tpu_custom_call.1} parent=1 // pred_region
      %130 = dma.done [#allocation10], 512
    $region65: #{tpu_custom_call.1} parent=1 // pred_fallthru
      _
    // Predicated region
    $region66: #{tpu_custom_call.1} parent=1 // pred_check
      _
    $region67: #{tpu_custom_call.1} parent=1 // pred_check_branch
      %132 = sbr.rel (0) target = $region69
    $region68: #{tpu_custom_call.1} parent=1 // pred_region
      %134 = dma.done [#allocation13], 512
    $region69: #{tpu_custom_call.1} parent=1 // pred_fallthru
      _
    %v135 = vld [vmem:[#allocation3] sm:$0xff]
    %v136 = vld [vmem:[#allocation3 + $0x8] sm:$0xff]
    %v137 = vld [vmem:[#allocation3 + $0x10] sm:$0xff]
    %v138 = vld [vmem:[#allocation3 + $0x18] sm:$0xff]
    %v139 = vld [vmem:[#allocation3 + $0x20] sm:$0xff]
    %v140 = vld [vmem:[#allocation3 + $0x28] sm:$0xff]
    %v141 = vld [vmem:[#allocation3 + $0x30] sm:$0xff]
    %v142 = vld [vmem:[#allocation3 + $0x38] sm:$0xff]
    %v143 = vld [vmem:[#allocation8] sm:$0xff]
    %v144 = vld [vmem:[#allocation8 + $0x8] sm:$0xff]
    %v145 = vld [vmem:[#allocation8 + $0x10] sm:$0xff]
    %v146 = vld [vmem:[#allocation8 + $0x18] sm:$0xff]
    %vm147 = vcmask 261120
    %v149 = vsel %vm147, %v135, 0
    %v152 = vsel %vm147, %v136, 0
    %v155 = vsel %vm147, %v137, 0
    %v158 = vsel %vm147, %v138, 0
    %v161 = vsel %vm147, %v139, 0
    %v164 = vsel %vm147, %v140, 0
    %v167 = vsel %vm147, %v141, 0
    %v170 = vsel %vm147, %v142, 0
    %172 = vmatpush.msra.mxu0 0.0
    %173 = vmatpush.msra.mxu0 0.0
    %174 = vmatpush.msra.mxu0 0.0
    %175 = vmatpush.msra.mxu0 0.0
    %176 = vmatpush.msra.mxu0 0.0
    %177 = vmatpush.msra.mxu0 0.0
    %178 = vmatpush.msra.mxu0 0.0
    %179 = vmatpush.msra.mxu0 0.0
    %180 = vmatpush.msra.mxu0 0.0
    %181 = vmatpush.msra.mxu0 0.0
    %182 = vmatpush.msra.mxu0 0.0
    %183 = vmatpush.msra.mxu0 0.0
    %184 = vmatpush.msra.mxu0 %v146
    %185 = vmatpush.msra.mxu0 %v145
    %186 = vmatpush.msra.mxu0 %v144
    %187 = vmatpush.msra.mxu0 %v143
    %188 = vmatmul.f32.gmra.mxu0 %v149
    %v189 = vpop.f32.mrf.mxu0
    %v190 = vadd.f32 0.0, %v189
    %191 = vmatmul.f32.gmra.mxu0 %v152
    %v192 = vpop.f32.mrf.mxu0
    %v193 = vadd.f32 0.0, %v192
    %194 = vmatmul.f32.gmra.mxu0 %v155
    %v195 = vpop.f32.mrf.mxu0
    %v196 = vadd.f32 0.0, %v195
    %197 = vmatmul.f32.gmra.mxu0 %v158
    %v198 = vpop.f32.mrf.mxu0
    %v199 = vadd.f32 0.0, %v198
    %200 = vmatmul.f32.gmra.mxu0 %v161
    %v201 = vpop.f32.mrf.mxu0
    %v202 = vadd.f32 0.0, %v201
    %203 = vmatmul.f32.gmra.mxu0 %v164
    %v204 = vpop.f32.mrf.mxu0
    %v205 = vadd.f32 0.0, %v204
    %206 = vmatmul.f32.gmra.mxu0 %v167
    %v207 = vpop.f32.mrf.mxu0
    %v208 = vadd.f32 0.0, %v207
    %209 = vmatmul.f32.gmra.mxu0 %v170
    %v210 = vpop.f32.mrf.mxu0
    %v211 = vadd.f32 0.0, %v210
    %212 = vdwg.mxu0
    %v221 = vrot.slane %v190, 1
    %v222 = vrot.slane %v193, 1
    %v223 = vrot.slane %v196, 1
    %v224 = vrot.slane %v199, 1
    %v225 = vrot.slane %v202, 1
    %v226 = vrot.slane %v205, 1
    %v227 = vrot.slane %v208, 1
    %v228 = vrot.slane %v211, 1
    %229 = vrot.lane.b32.xlu0 %v221, 96
    %v230 = vpop.permute.xlu0 %229
    %231 = vrot.lane.b32.xlu0 %v222, 96
    %v232 = vpop.permute.xlu0 %231
    %233 = vrot.lane.b32.xlu0 %v223, 96
    %v234 = vpop.permute.xlu0 %233
    %235 = vrot.lane.b32.xlu0 %v224, 96
    %v236 = vpop.permute.xlu0 %235
    %237 = vrot.lane.b32.xlu0 %v225, 96
    %v238 = vpop.permute.xlu0 %237
    %239 = vrot.lane.b32.xlu0 %v226, 96
    %v240 = vpop.permute.xlu0 %239
    %241 = vrot.lane.b32.xlu0 %v227, 96
    %v242 = vpop.permute.xlu0 %241
    %243 = vrot.lane.b32.xlu0 %v228, 96
    %v244 = vpop.permute.xlu0 %243
    %v253 = vadd.f32 %v190, %v230
    %v254 = vadd.f32 %v193, %v232
    %v255 = vadd.f32 %v196, %v234
    %v256 = vadd.f32 %v199, %v236
    %v257 = vadd.f32 %v202, %v238
    %v258 = vadd.f32 %v205, %v240
    %v259 = vadd.f32 %v208, %v242
    %v260 = vadd.f32 %v211, %v244
    %v261 = vrot.slane %v190, 2
    %v262 = vrot.slane %v193, 2
    %v263 = vrot.slane %v196, 2
    %v264 = vrot.slane %v199, 2
    %v265 = vrot.slane %v202, 2
    %v266 = vrot.slane %v205, 2
    %v267 = vrot.slane %v208, 2
    %v268 = vrot.slane %v211, 2
    %269 = vrot.lane.b32.xlu0 %v261, 64
    %v270 = vpop.permute.xlu0 %269
    %271 = vrot.lane.b32.xlu0 %v262, 64
    %v272 = vpop.permute.xlu0 %271
    %273 = vrot.lane.b32.xlu0 %v263, 64
    %v274 = vpop.permute.xlu0 %273
    %275 = vrot.lane.b32.xlu0 %v264, 64
    %v276 = vpop.permute.xlu0 %275
    %277 = vrot.lane.b32.xlu0 %v265, 64
    %v278 = vpop.permute.xlu0 %277
    %279 = vrot.lane.b32.xlu0 %v266, 64
    %v280 = vpop.permute.xlu0 %279
    %281 = vrot.lane.b32.xlu0 %v267, 64
    %v282 = vpop.permute.xlu0 %281
    %283 = vrot.lane.b32.xlu0 %v268, 64
    %v284 = vpop.permute.xlu0 %283
    %v293 = vadd.f32 %v253, %v270
    %v294 = vadd.f32 %v254, %v272
    %v295 = vadd.f32 %v255, %v274
    %v296 = vadd.f32 %v256, %v276
    %v297 = vadd.f32 %v257, %v278
    %v298 = vadd.f32 %v258, %v280
    %v299 = vadd.f32 %v259, %v282
    %v300 = vadd.f32 %v260, %v284
    %vm301 = vcmask 259072
    %v302 = vsel %vm301, %v293, -inf
    %v303 = vrot.slane %v302, 4
    %v304 = vmax.f32 %v302, %v303
    %v305 = vrot.slane %v304, 2
    %v306 = vmax.f32 %v304, %v305
    %v307 = vrot.slane %v306, 1
    %v308 = vmax.f32 %v306, %v307
    %v309 = vsel %vm301, %v294, -inf
    %v310 = vrot.slane %v309, 4
    %v311 = vmax.f32 %v309, %v310
    %v312 = vrot.slane %v311, 2
    %v313 = vmax.f32 %v311, %v312
    %v314 = vrot.slane %v313, 1
    %v315 = vmax.f32 %v313, %v314
    %v316 = vsel %vm301, %v295, -inf
    %v317 = vrot.slane %v316, 4
    %v318 = vmax.f32 %v316, %v317
    %v319 = vrot.slane %v318, 2
    %v320 = vmax.f32 %v318, %v319
    %v321 = vrot.slane %v320, 1
    %v322 = vmax.f32 %v320, %v321
    %v323 = vsel %vm301, %v296, -inf
    %v324 = vrot.slane %v323, 4
    %v325 = vmax.f32 %v323, %v324
    %v326 = vrot.slane %v325, 2
    %v327 = vmax.f32 %v325, %v326
    %v328 = vrot.slane %v327, 1
    %v329 = vmax.f32 %v327, %v328
    %v330 = vsel %vm301, %v297, -inf
    %v331 = vrot.slane %v330, 4
    %v332 = vmax.f32 %v330, %v331
    %v333 = vrot.slane %v332, 2
    %v334 = vmax.f32 %v332, %v333
    %v335 = vrot.slane %v334, 1
    %v336 = vmax.f32 %v334, %v335
    %v337 = vsel %vm301, %v298, -inf
    %v338 = vrot.slane %v337, 4
    %v339 = vmax.f32 %v337, %v338
    %v340 = vrot.slane %v339, 2
    %v341 = vmax.f32 %v339, %v340
    %v342 = vrot.slane %v341, 1
    %v343 = vmax.f32 %v341, %v342
    %v344 = vsel %vm301, %v299, -inf
    %v345 = vrot.slane %v344, 4
    %v346 = vmax.f32 %v344, %v345
    %v347 = vrot.slane %v346, 2
    %v348 = vmax.f32 %v346, %v347
    %v349 = vrot.slane %v348, 1
    %v350 = vmax.f32 %v348, %v349
    %v351 = vsel %vm301, %v300, -inf
    %v352 = vrot.slane %v351, 4
    %v353 = vmax.f32 %v351, %v352
    %v354 = vrot.slane %v353, 2
    %v355 = vmax.f32 %v353, %v354
    %v356 = vrot.slane %v355, 1
    %v357 = vmax.f32 %v355, %v356
    %v358 = vld [vmem:[%s3] sm:$0x1]
    %v360 = vperm.slane %v358, 0
    %v362 = vadd.f32 %v308, %v360
    %v363 = vadd.f32 %v315, %v360
    %v364 = vadd.f32 %v322, %v360
    %v365 = vadd.f32 %v329, %v360
    %v366 = vadd.f32 %v336, %v360
    %v367 = vadd.f32 %v343, %v360
    %v368 = vadd.f32 %v350, %v360
    %v369 = vadd.f32 %v357, %v360
    %v370 = vmax.f32 %v362, 0.0
    %v371 = vmax.f32 %v363, 0.0
    %v372 = vmax.f32 %v364, 0.0
    %v373 = vmax.f32 %v365, 0.0
    %v374 = vmax.f32 %v366, 0.0
    %v375 = vmax.f32 %v367, 0.0
    %v376 = vmax.f32 %v368, 0.0
    %v377 = vmax.f32 %v369, 0.0
    %v378 = vld [vmem:[#allocation6] sm:$0xf]
    %v379 = vld [vmem:[#allocation6 + $0x4] sm:$0xf]
    %v380 = vmax.f32 %v378, 0.0
    %v381 = vmax.f32 %v379, 0.0
    %v382 = vld [vmem:[#allocation9] sm:$0xff]
    %v383 = vld [vmem:[#allocation9 + $0x8] sm:$0xff]
    %v384 = vld [vmem:[#allocation9 + $0x10] sm:$0xff]
    %v385 = vld [vmem:[#allocation9 + $0x18] sm:$0xff]
    %v386 = vld [vmem:[#allocation11] sm:$0xff]
    %v387 = vld [vmem:[#allocation11 + $0x8] sm:$0xff]
    %v388 = vld [vmem:[#allocation11 + $0x10] sm:$0xff]
    %v389 = vld [vmem:[#allocation11 + $0x18] sm:$0xff]
    %392 = vst [vmem:[#allocation1] ss:$2 sm:$0xff] %v380
    %s393 = scalar_lea.vmem [#allocation1], 1
    %394 = vst [vmem:[%s393] ss:$2 sm:$0xff] %v381
    %v395 = vld.sshfl [vmem:[#allocation1] sm:$0xff pattern:$0x75316420]
    %v396 = vsel %vm147, %v395, 0
    %398 = vmatpush.msra.mxu0 0.0
    %399 = vmatpush.msra.mxu0 0.0
    %400 = vmatpush.msra.mxu0 0.0
    %401 = vmatpush.msra.mxu0 0.0
    %402 = vmatpush.msra.mxu0 0.0
    %403 = vmatpush.msra.mxu0 0.0
    %404 = vmatpush.msra.mxu0 0.0
    %405 = vmatpush.msra.mxu0 0.0
    %406 = vmatpush.msra.mxu0 0.0
    %407 = vmatpush.msra.mxu0 0.0
    %408 = vmatpush.msra.mxu0 0.0
    %409 = vmatpush.msra.mxu0 0.0
    %410 = vmatpush.msra.mxu0 %v389
    %411 = vmatpush.msra.mxu0 %v388
    %412 = vmatpush.msra.mxu0 %v387
    %413 = vmatpush.msra.mxu0 %v386
    %414 = vmatmul.f32.gmra.mxu0 %v396
    %v415 = vpop.f32.mrf.mxu0
    %v416 = vadd.f32 0.0, %v415
    %417 = vdwg.mxu0
    %v426 = vrot.slane %v371, 7
    %vm427 = vcmask 1041409
    %v428 = vsel %vm427, %v426, %v370
    %v429 = vrot.slane %v372, 6
    %vm430 = vcmask 1042434
    %v431 = vsel %vm430, %v429, %v428
    %v432 = vrot.slane %v373, 5
    %vm433 = vcmask 1043459
    %v434 = vsel %vm433, %v432, %v431
    %v435 = vrot.slane %v374, 4
    %vm436 = vcmask 1044484
    %v437 = vsel %vm436, %v435, %v434
    %v438 = vrot.slane %v375, 3
    %vm439 = vcmask 1045509
    %v440 = vsel %vm439, %v438, %v437
    %v441 = vrot.slane %v376, 2
    %vm442 = vcmask 1046534
    %v443 = vsel %vm442, %v441, %v440
    %v444 = vrot.slane %v377, 1
    %vm445 = vcmask 1047559
    %v446 = vsel %vm445, %v444, %v443
    %v447 = vsel %vm147, %v446, 0
    %449 = vmatpush.msra.mxu0 0.0
    %450 = vmatpush.msra.mxu0 0.0
    %451 = vmatpush.msra.mxu0 0.0
    %452 = vmatpush.msra.mxu0 0.0
    %453 = vmatpush.msra.mxu0 0.0
    %454 = vmatpush.msra.mxu0 0.0
    %455 = vmatpush.msra.mxu0 0.0
    %456 = vmatpush.msra.mxu0 0.0
    %457 = vmatpush.msra.mxu0 0.0
    %458 = vmatpush.msra.mxu0 0.0
    %459 = vmatpush.msra.mxu0 0.0
    %460 = vmatpush.msra.mxu0 0.0
    %461 = vmatpush.msra.mxu0 %v385
    %462 = vmatpush.msra.mxu0 %v384
    %463 = vmatpush.msra.mxu0 %v383
    %464 = vmatpush.msra.mxu0 %v382
    %465 = vmatmul.f32.gmra.mxu0 %v447
    %v466 = vpop.f32.mrf.mxu0
    %v467 = vadd.f32 %v416, %v466
    %468 = vdwg.mxu0
    %v469 = vld [vmem:[%s5] sm:$0x1]
    %v471 = vperm.slane %v469, 0
    %v473 = vadd.f32 %v467, %v471
    %v474 = vmax.f32 %v473, 0.0
    %v476 = vrot.slane %v474, 4
    %v478 = vld [vmem:[%s7] sm:$0x1]
    %v480 = vperm.slane %v478, 0
    %v482 = vmul.f32 %v474, %v480
    %v483 = vmul.f32 %v476, %v480
    %vm484 = vcmask 257024
    %v485 = vsel %vm484, %v482, 0.0
    %486 = vadd.xlane.f32.xlu0 %v485
    %v487 = vpop.xlane.xlu0 %486
    %v488 = vsel %vm484, %v483, 0.0
    %489 = vadd.xlane.f32.xlu0 %v488
    %v490 = vpop.xlane.xlu0 %489
    %v491 = vld [vmem:[#allocation2] sm:$0x1]
    %v493 = vperm.slane %v491, 0
    %v495 = vadd.f32 %v487, %v493
    %v496 = vadd.f32 %v490, %v493
    %vm497 = vcmask 3072
    %v498 = vsel %vm497, %v495, -inf
    %v499 = vrot.slane %v498, 4
    %v500 = vmax.f32 %v498, %v499
    %v501 = vrot.slane %v500, 2
    %v502 = vmax.f32 %v500, %v501
    %v503 = vrot.slane %v502, 1
    %v504 = vmax.f32 %v502, %v503
    %v505 = vsel %vm497, %v496, -inf
    %v506 = vrot.slane %v505, 4
    %v507 = vmax.f32 %v505, %v506
    %v508 = vrot.slane %v507, 2
    %v509 = vmax.f32 %v507, %v508
    %v510 = vrot.slane %v509, 1
    %v511 = vmax.f32 %v509, %v510
    %v512 = vsub.f32 %v495, %v504
    %v513 = vsub.f32 %v496, %v511
    %v514 = vmul.f32 %v512, 1.442695
    %v515 = vpow.pop %v514
    %v516 = vmul.f32 %v513, 1.442695
    %v517 = vpow.pop %v516
    %v518 = vsel %vm497, %v515, 0.0
    %v519 = vrot.slane %v518, 4
    %v520 = vadd.f32 %v518, %v519
    %v521 = vrot.slane %v520, 2
    %v522 = vadd.f32 %v520, %v521
    %v523 = vrot.slane %v522, 1
    %v524 = vadd.f32 %v522, %v523
    %v525 = vsel %vm497, %v517, 0.0
    %v526 = vrot.slane %v525, 4
    %v527 = vadd.f32 %v525, %v526
    %v528 = vrot.slane %v527, 2
    %v529 = vadd.f32 %v527, %v528
    %v530 = vrot.slane %v529, 1
    %v531 = vadd.f32 %v529, %v530
    %v532 = vrcp.pop %v524
    %v533 = vrcp.pop %v531
    %v534 = vmul.f32 %v515, %v532
    %v535 = vmul.f32 %v517, %v533
    %537 = vset.pattern.permute.xlu0 0
    %538 = vperm.xlu0 %537, %v534
    %v539 = vpop.permute.xlu0 %538
    %541 = vset.pattern.permute.xlu0 0
    %542 = vperm.xlu0 %541, %v535
    %v543 = vpop.permute.xlu0 %542
    %v544 = vrot.slane %v539, 1
    %v545 = vrot.slane %v539, 2
    %v546 = vrot.slane %v539, 3
    %v547 = vrot.slane %v543, 1
    %v548 = vrot.slane %v543, 2
    %v549 = vrot.slane %v543, 3
    %v558 = vmul.f32 %v370, %v539
    %v559 = vmul.f32 %v371, %v544
    %v560 = vmul.f32 %v372, %v545
    %v561 = vmul.f32 %v373, %v546
    %v562 = vmul.f32 %v374, %v543
    %v563 = vmul.f32 %v375, %v547
    %v564 = vmul.f32 %v376, %v548
    %v565 = vmul.f32 %v377, %v549
    %v574 = vrot.slane %v559, 7
    %v575 = vsel %vm427, %v574, %v558
    %v576 = vrot.slane %v560, 6
    %v577 = vsel %vm430, %v576, %v575
    %v578 = vrot.slane %v561, 5
    %v579 = vsel %vm433, %v578, %v577
    %v580 = vrot.slane %v563, 7
    %v581 = vsel %vm427, %v580, %v562
    %v582 = vrot.slane %v564, 6
    %v583 = vsel %vm430, %v582, %v581
    %v584 = vrot.slane %v565, 5
    %v585 = vsel %vm433, %v584, %v583
    %v588 = vsel %vm484, %v579, 0.0
    %v589 = vrot.slane %v588, 4
    %v590 = vadd.f32 %v588, %v589
    %v591 = vrot.slane %v590, 2
    %v592 = vadd.f32 %v590, %v591
    %v593 = vrot.slane %v592, 1
    %v594 = vadd.f32 %v592, %v593
    %v595 = vsel %vm484, %v585, 0.0
    %v596 = vrot.slane %v595, 4
    %v597 = vadd.f32 %v595, %v596
    %v598 = vrot.slane %v597, 2
    %v599 = vadd.f32 %v597, %v598
    %v600 = vrot.slane %v599, 1
    %v601 = vadd.f32 %v599, %v600
    %v602 = vld [vmem:[#allocation12] sm:$0xff]
    %v603 = vld [vmem:[#allocation12 + $0x8] sm:$0xff]
    %v604 = vld [vmem:[#allocation12 + $0x10] sm:$0xff]
    %v605 = vld [vmem:[#allocation12 + $0x18] sm:$0xff]
    %v606 = vld [vmem:[%s10] sm:$0x1]
    %v608 = vperm.slane %v606, 0
    %v612 = vrot.slane %v601, 7
    %v613 = vsel %vm427, %v612, %v594
    %v614 = vsel %vm147, %v613, 0
    %616 = vmatpush.msra.mxu0 0.0
    %617 = vmatpush.msra.mxu0 0.0
    %618 = vmatpush.msra.mxu0 0.0
    %619 = vmatpush.msra.mxu0 0.0
    %620 = vmatpush.msra.mxu0 0.0
    %621 = vmatpush.msra.mxu0 0.0
    %622 = vmatpush.msra.mxu0 0.0
    %623 = vmatpush.msra.mxu0 0.0
    %624 = vmatpush.msra.mxu0 0.0
    %625 = vmatpush.msra.mxu0 0.0
    %626 = vmatpush.msra.mxu0 0.0
    %627 = vmatpush.msra.mxu0 0.0
    %628 = vmatpush.msra.mxu0 %v605
    %629 = vmatpush.msra.mxu0 %v604
    %630 = vmatpush.msra.mxu0 %v603
    %631 = vmatpush.msra.mxu0 %v602
    %632 = vmatmul.f32.gmra.mxu0 %v614
    %v633 = vpop.f32.mrf.mxu0
    %v634 = vadd.f32 %v608, %v633
    %635 = vdwg.mxu0
    %vm636 = vcmask 254976
    %637 = vst.msk [vmem:[#allocation14] sm:$0x3] %vm636, %v634
    // Predicated region
    $region70: #{tpu_custom_call.1} parent=1 // pred_check
      _
    $region71: #{tpu_custom_call.1} parent=1 // pred_check_branch
      %639 = sbr.rel (0) target = $region73
    $region72: #{tpu_custom_call.1} parent=1 // pred_region
      %641 = vsyncadd [#allocation5], 0
      %s643 = sshll.u32 [#allocation14], 4
      %s644 = int_to_ptr.vmem [resolvable:$true] %s643
      %s645 = sshll.u32 %s11, 4
      %s646 = int_to_ptr.hbm [resolvable:$true] %s645
      %648 = dma.vmem_to_hbm [thread:$0]  %s644, 32, %s646, [#allocation5]
    $region73: #{tpu_custom_call.1} parent=1 // pred_fallthru
      _
    // Predicated region
    $region74: #{tpu_custom_call.1} parent=1 // pred_check
      _
    $region75: #{tpu_custom_call.1} parent=1 // pred_check_branch
      %650 = sbr.rel (0) target = $region77
    $region76: #{tpu_custom_call.1} parent=1 // pred_region
      %652 = dma.done [#allocation5], 32
    $region77: #{tpu_custom_call.1} parent=1 // pred_fallthru
      _
    %653 = vsyncpa [#allocation4], 1
    %654 = vsyncpa [#allocation7], 1
    %655 = vsyncpa [#allocation10], 1
    %656 = vsyncpa [#allocation13], 1
    %657 = vsyncpa [#allocation5], 1

</llo_original>
